<compile_context>
chip_gen: v6e
topology: v6e:2x2x1
jax: 0.10.0
libtpu: 0.0.40
codegen_flags: <defaults>
</compile_context>

<pallas_src>
import jax
import jax.numpy as jnp
from jax.experimental import pallas as pl
from jax.experimental.pallas import tpu as pltpu

HIDDEN1 = 256   # fc1 out (fc1 is lazily sized to x.size(1) in torch)
HIDDEN2 = 512   # fc2 out
OUT = 1         # fc3 out


def _mlp_kernel(x_ref, w1_ref, b1_ref, w2_ref, b2_ref, w3_ref, b3_ref, o_ref):
    # fc1 (bf16 MXU, f32 acc) + bias + ReLU in f32
    h1 = jnp.dot(x_ref[...], w1_ref[...], preferred_element_type=jnp.float32)
    h1 = jnp.maximum(h1 + b1_ref[...], 0.0)
    # fc2 (bf16 MXU, f32 acc) + bias + ReLU in f32
    h2 = jnp.dot(h1.astype(jnp.bfloat16), w2_ref[...],
                 preferred_element_type=jnp.float32)
    h2 = jnp.maximum(h2 + b2_ref[...], 0.0)
    # fc3: N=1 "matmul" done as VPU multiply + lane (XLU) reduction.
    logits = jnp.sum(h2 * w3_ref[...], axis=-1, keepdims=True) + b3_ref[0]
    o_ref[...] = jax.nn.sigmoid(logits).astype(o_ref.dtype)


def domain_classifier_forward(x, params, tb=None):
    """x: (B, D_in) float32.  Returns (B, 1) float32 in [0, 1]."""
    w1, b1, w2, b2, w3, b3 = params
    B, D = x.shape

    if tb is None:
        # Full batch if small; otherwise 512-row tiles (85%+ of HBM roofline,
        # fits comfortably inside v7x's 64 MiB VMEM / v5e's scoped budget).
        tb = B if B <= 512 else 512

    # Halve HBM bytes for the dominant streamed operand.
    xb = x.astype(jnp.bfloat16)

    resident = lambda arr: pl.BlockSpec(arr.shape, lambda i: (0,) * arr.ndim)

    return pl.pallas_call(
        _mlp_kernel,
        out_shape=jax.ShapeDtypeStruct((B, OUT), jnp.float32),
        grid=(pl.cdiv(B, tb),),
        in_specs=[
            pl.BlockSpec((tb, D), lambda i: (i, 0)),          # x: batch-tiled
            resident(w1),                                     # (D, 256) bf16
            resident(b1),                                     # (1, 256) f32
            resident(w2),                                     # (256, 512) bf16
            resident(b2),                                     # (1, 512) f32
            resident(w3),                                     # (1, 512) f32 row
            pl.BlockSpec(memory_space=pltpu.MemorySpace.SMEM),  # b3 scalar
        ],
        out_specs=pl.BlockSpec((tb, OUT), lambda i: (i, 0)),
        compiler_params=pltpu.CompilerParams(
            dimension_semantics=("parallel",),
            vmem_limit_bytes=32 * 1024 * 1024,
        ),
    )(xb, w1, b1, w2, b2, w3, b3)


def init_params(key, in_features):
    """Deterministic synthetic init (uniform, Linear-style fan-in scaling)."""
    ks = jax.random.split(key, 6)

    def lin(kw, kb, fan_in, fan_out, w_dtype):
        bound = 1.0 / jnp.sqrt(jnp.float32(fan_in))
        w = jax.random.uniform(kw, (fan_in, fan_out), jnp.float32, -bound, bound)
        b = jax.random.uniform(kb, (1, fan_out), jnp.float32, -bound, bound)
        return w.astype(w_dtype), b

    w1, b1 = lin(ks[0], ks[1], in_features, HIDDEN1, jnp.bfloat16)
    w2, b2 = lin(ks[2], ks[3], HIDDEN1, HIDDEN2, jnp.bfloat16)
    w3, b3_full = lin(ks[4], ks[5], HIDDEN2, OUT, jnp.float32)
    w3_row = w3.T                      # (1, 512) f32 row for the VPU reduction
    b3 = b3_full.reshape((OUT,))       # (1,) f32 scalar, lives in SMEM
    return (w1, b1, w2, b2, w3_row, b3)


def _reference(x, params):
    """Pure-JAX reference with the same bf16-matmul / f32-elementwise recipe."""
    w1, b1, w2, b2, w3_row, b3 = params
    xb = x.astype(jnp.bfloat16)
    h1 = jnp.maximum(
        jnp.dot(xb, w1, preferred_element_type=jnp.float32) + b1, 0.0)
    h2 = jnp.maximum(
        jnp.dot(h1.astype(jnp.bfloat16), w2,
                preferred_element_type=jnp.float32) + b2, 0.0)
    logits = jnp.sum(h2 * w3_row, axis=-1, keepdims=True) + b3[0]
    return jax.nn.sigmoid(logits)


if __name__ == "__main__":
    key = jax.random.PRNGKey(0)
    k_x, k_p = jax.random.split(key)

    B, D_IN = 8, 32   # small batch, small feature dim (fc1 lazily sized to D_IN)
    x = jax.random.normal(k_x, (B, D_IN), jnp.float32)
    params = init_params(k_p, D_IN)

    out = domain_classifier_forward(x, params)
    out = jax.block_until_ready(out)

    ref = _reference(x, params)
    assert out.shape == (B, OUT)
    assert bool(jnp.all(jnp.isfinite(out)))
    assert jnp.allclose(out, ref, atol=1e-4, rtol=1e-4)
    print("KERNEL_OK")
</pallas_src>

<mosaic_0001>
module attributes {stable_mosaic.version = 11 : i64} {
  func.func @_mlp_kernel(%arg0: i32, %arg1: memref<8x32xbf16, #tpu.memory_space<vmem>>, %arg2: memref<32x256xbf16, #tpu.memory_space<vmem>>, %arg3: memref<1x256xf32, #tpu.memory_space<vmem>>, %arg4: memref<256x512xbf16, #tpu.memory_space<vmem>>, %arg5: memref<1x512xf32, #tpu.memory_space<vmem>>, %arg6: memref<1x512xf32, #tpu.memory_space<vmem>>, %arg7: memref<1xf32, #tpu.memory_space<smem>>, %arg8: memref<8x1xf32, #tpu.memory_space<vmem>>) attributes {dimension_semantics = [#tpu.dimension_semantics<parallel>], iteration_bounds = array<i64: 1>, scalar_prefetch = 0 : i64, scratch_operands = 0 : i64, tpu.core_type = #tpu.core_type<tc>, window_params = [{transform_indices = @transform_0, window_bounds = array<i64: 8, 32>}, {pipeline_mode = #tpu.pipeline_mode<synchronous>, transform_indices = @transform_1, window_bounds = array<i64: 32, 256>}, {pipeline_mode = #tpu.pipeline_mode<synchronous>, transform_indices = @transform_2, window_bounds = array<i64: 1, 256>}, {pipeline_mode = #tpu.pipeline_mode<synchronous>, transform_indices = @transform_3, window_bounds = array<i64: 256, 512>}, {pipeline_mode = #tpu.pipeline_mode<synchronous>, transform_indices = @transform_4, window_bounds = array<i64: 1, 512>}, {pipeline_mode = #tpu.pipeline_mode<synchronous>, transform_indices = @transform_5, window_bounds = array<i64: 1, 512>}, {transform_indices = @transform_6, window_bounds = array<i64: 1>}, {transform_indices = @transform_7, window_bounds = array<i64: 8, 1>}]} {
    %c0 = arith.constant 0 : index
    %c0_0 = arith.constant 0 : index
    %0 = vector.load %arg1[%c0, %c0_0] : memref<8x32xbf16, #tpu.memory_space<vmem>>, vector<8x32xbf16>
    %c0_1 = arith.constant 0 : index
    %c0_2 = arith.constant 0 : index
    %1 = vector.load %arg2[%c0_1, %c0_2] : memref<32x256xbf16, #tpu.memory_space<vmem>>, vector<32x256xbf16>
    %cst = arith.constant dense<0.000000e+00> : vector<8x256xf32>
    %2 = tpu.matmul %0, %1, %cst {dimension_numbers = #tpu.dot_dimension_numbers<[1], [0], [0], [1], [0, 0, 1, 1], [], []>} : vector<8x32xbf16>, vector<32x256xbf16>, vector<8x256xf32> -> vector<8x256xf32>
    %c0_3 = arith.constant 0 : index
    %c0_4 = arith.constant 0 : index
    %3 = vector.load %arg3[%c0_3, %c0_4] : memref<1x256xf32, #tpu.memory_space<vmem>>, vector<1x256xf32>
    %4 = vector.broadcast %3 : vector<1x256xf32> to vector<8x256xf32>
    %5 = arith.addf %2, %4 : vector<8x256xf32>
    %cst_5 = arith.constant 0.000000e+00 : f32
    %6 = vector.broadcast %cst_5 : f32 to vector<8x256xf32>
    %7 = arith.maximumf %5, %6 : vector<8x256xf32>
    %8 = arith.truncf %7 : vector<8x256xf32> to vector<8x256xbf16>
    %c0_6 = arith.constant 0 : index
    %c0_7 = arith.constant 0 : index
    %9 = vector.load %arg4[%c0_6, %c0_7] : memref<256x512xbf16, #tpu.memory_space<vmem>>, vector<256x512xbf16>
    %cst_8 = arith.constant dense<0.000000e+00> : vector<8x512xf32>
    %10 = tpu.matmul %8, %9, %cst_8 {dimension_numbers = #tpu.dot_dimension_numbers<[1], [0], [0], [1], [0, 0, 1, 1], [], []>} : vector<8x256xbf16>, vector<256x512xbf16>, vector<8x512xf32> -> vector<8x512xf32>
    %c0_9 = arith.constant 0 : index
    %c0_10 = arith.constant 0 : index
    %11 = vector.load %arg5[%c0_9, %c0_10] : memref<1x512xf32, #tpu.memory_space<vmem>>, vector<1x512xf32>
    %12 = vector.broadcast %11 : vector<1x512xf32> to vector<8x512xf32>
    %13 = arith.addf %10, %12 : vector<8x512xf32>
    %cst_11 = arith.constant 0.000000e+00 : f32
    %14 = vector.broadcast %cst_11 : f32 to vector<8x512xf32>
    %15 = arith.maximumf %13, %14 : vector<8x512xf32>
    %c0_12 = arith.constant 0 : index
    %c0_13 = arith.constant 0 : index
    %16 = vector.load %arg6[%c0_12, %c0_13] : memref<1x512xf32, #tpu.memory_space<vmem>>, vector<1x512xf32>
    %17 = vector.broadcast %16 : vector<1x512xf32> to vector<8x512xf32>
    %18 = arith.mulf %15, %17 : vector<8x512xf32>
    %cst_14 = arith.constant dense<0.000000e+00> : vector<8xf32>
    %19 = vector.multi_reduction <add>, %18, %cst_14 [1] : vector<8x512xf32> to vector<8xf32>
    %20 = vector.shape_cast %19 : vector<8xf32> to vector<8x1xf32>
    %c0_15 = arith.constant 0 : index
    %21 = memref.load %arg7[%c0_15] : memref<1xf32, #tpu.memory_space<smem>>
    %22 = vector.broadcast %21 : f32 to vector<8x1xf32>
    %23 = arith.addf %20, %22 : vector<8x1xf32>
    %24 = arith.negf %23 : vector<8x1xf32>
    %25 = math.exp %24 : vector<8x1xf32>
    %cst_16 = arith.constant 1.000000e+00 : f32
    %26 = vector.broadcast %cst_16 : f32 to vector<8x1xf32>
    %27 = arith.addf %26, %25 : vector<8x1xf32>
    %28 = arith.divf %26, %27 : vector<8x1xf32>
    %c0_17 = arith.constant 0 : index
    %c0_18 = arith.constant 0 : index
    %29 = vector.load %arg8[%c0_17, %c0_18] : memref<8x1xf32, #tpu.memory_space<vmem>>, vector<8x1xf32>
    tpu.vector_store %arg8[%c0_17, %c0_18], %28 {strides = array<i32>} : memref<8x1xf32, #tpu.memory_space<vmem>>, vector<8x1xf32>,
    return
  }
  func.func @transform_0(%arg0: i32) -> (i32, i32) {
    %c0_i32 = arith.constant 0 : i32
    %c0_i32_0 = arith.constant 0 : i32
    return %arg0, %c0_i32 : i32, i32
  }
  func.func @transform_1(%arg0: i32) -> (i32, i32) {
    %c0_i32 = arith.constant 0 : i32
    %c0_i32_0 = arith.constant 0 : i32
    %c0_i32_1 = arith.constant 0 : i32
    return %c0_i32, %c0_i32_0 : i32, i32
  }
  func.func @transform_2(%arg0: i32) -> (i32, i32) {
    %c0_i32 = arith.constant 0 : i32
    %c0_i32_0 = arith.constant 0 : i32
    %c0_i32_1 = arith.constant 0 : i32
    return %c0_i32, %c0_i32_0 : i32, i32
  }
  func.func @transform_3(%arg0: i32) -> (i32, i32) {
    %c0_i32 = arith.constant 0 : i32
    %c0_i32_0 = arith.constant 0 : i32
    %c0_i32_1 = arith.constant 0 : i32
    return %c0_i32, %c0_i32_0 : i32, i32
  }
  func.func @transform_4(%arg0: i32) -> (i32, i32) {
    %c0_i32 = arith.constant 0 : i32
    %c0_i32_0 = arith.constant 0 : i32
    %c0_i32_1 = arith.constant 0 : i32
    return %c0_i32, %c0_i32_0 : i32, i32
  }
  func.func @transform_5(%arg0: i32) -> (i32, i32) {
    %c0_i32 = arith.constant 0 : i32
    %c0_i32_0 = arith.constant 0 : i32
    %c0_i32_1 = arith.constant 0 : i32
    return %c0_i32, %c0_i32_0 : i32, i32
  }
  func.func @transform_6(%arg0: i32) -> i32 {
    %c0_i32 = arith.constant 0 : i32
    %c0_i32_0 = arith.constant 0 : i32
    return %c0_i32 : i32
  }
  func.func @transform_7(%arg0: i32) -> (i32, i32) {
    %c0_i32 = arith.constant 0 : i32
    %c0_i32_0 = arith.constant 0 : i32
    return %arg0, %c0_i32 : i32, i32
  }
}

</mosaic_0001>

<llo_original>
// kernel: tpu_custom_call.1
$region0: #{tpu_custom_call.1}
  #allocation0 [shape = 'u32[]', space=smem, size = 0x4, offset = 0x4, fixed_abs, tag = 'smem constant byte address 0x4 - core index']
  #allocation1 [shape = 'u32[144,128]{1,0:T(1,128)}', space=vmem, size = 0x12000, scoped, tag = 'internal scratch']
  #allocation2 [shape = 'f32[1]{0:T(128)S(6)}', space=smem, size = 0x200, scoped, tag = 'scoped memory for tpu_custom_call.1']
  %s0 = inlined_call_operand.hbm [shape: bf16[8,32], index: 0, kind: input, shape index: {}]
  %s1 = inlined_call_operand.hbm [shape: bf16[32,256], index: 1, kind: input, shape index: {}]
  %s2 = inlined_call_operand.hbm [shape: f32[1,256], index: 2, kind: input, shape index: {}]
  %s3 = inlined_call_operand.hbm [shape: bf16[256,512], index: 3, kind: input, shape index: {}]
  %s4 = inlined_call_operand.vmem [shape: f32[1,512], index: 4, kind: input, shape index: {}]
  %s5 = inlined_call_operand.vmem [shape: f32[1,512], index: 5, kind: input, shape index: {}]
  %s6 = inlined_call_operand.<no memory space> [shape: f32[1], index: 6, kind: input, shape index: {}]
  %s7 = inlined_call_operand.vmem [shape: f32[8,1], index: 7, kind: output, shape index: {}]
  %s8 = sld [smem:[#allocation0]]
  $region54: #{tpu_custom_call.1} parent=0
    _
  %s10 = ssub.s32 1, %s8
  %s11 = scalar_select 0, %s10, %s8
  %12 = sst [smem:[#allocation2]] %s6
  $region1: #{tpu_custom_call.1} parent=0
    #allocation3 [shape = 'u8[2048]{0}', space=vmem, size = 0x800, scoped, tag = 'input window, operand 0, single buffered']
    #allocation4 [shape = 's32[1]{0}', space=sflag, size = 0x4, scoped, tag = 'scoped memory for tpu_custom_call.1']
    #allocation5 [shape = 'u8[16384]{0}', space=vmem, size = 0x4000, scoped, tag = 'input window, operand 1, single buffered']
    #allocation6 [shape = 's32[1]{0}', space=sflag, size = 0x4, scoped, tag = 'scoped memory for tpu_custom_call.1']
    #allocation7 [shape = 'u8[1024]{0}', space=vmem, size = 0x400, scoped, tag = 'input window, operand 2, single buffered']
    #allocation8 [shape = 'u8[262144]{0}', space=vmem, size = 0x40000, scoped, tag = 'input window, operand 3, single buffered']
    #allocation9 [shape = 's32[1]{0}', space=sflag, size = 0x4, scoped, tag = 'scoped memory for tpu_custom_call.1']
    %13 = vsyncpa [#allocation4], 0
    %14 = vsyncpa [#allocation6], 0
    %15 = vsyncpa [#allocation9], 0
    // Predicated region
    $region2: #{tpu_custom_call.1} parent=1 // pred_check
      _
    $region3: #{tpu_custom_call.1} parent=1 // pred_check_branch
      %17 = sbr.rel (0) target = $region5
    $region4: #{tpu_custom_call.1} parent=1 // pred_region
      %s19 = ssub.s32 64, 64
      %20 = vsyncadd [#allocation4], %s19
      %s22 = sshll.u32 [#allocation3], 4
      %s23 = int_to_ptr.vmem [resolvable:$true] %s22
      %25 = dma.hbm_to_vmem [thread:$0]  %s0, 64, %s23, [#allocation4]
    $region5: #{tpu_custom_call.1} parent=1 // pred_fallthru
      _
    // Predicated region
    $region6: #{tpu_custom_call.1} parent=1 // pred_check
      _
    $region7: #{tpu_custom_call.1} parent=1 // pred_check_branch
      %27 = sbr.rel (0) target = $region9
    $region8: #{tpu_custom_call.1} parent=1 // pred_region
      %s29 = ssub.s32 512, 512
      %30 = vsyncadd [#allocation6], %s29
      %s31 = sshll.u32 [#allocation5], 4
      %s32 = int_to_ptr.vmem [resolvable:$true] %s31
      %37 = dma.hbm_to_vmem [thread:$0]  %s1, 512, %s32, [#allocation6], 128, 128, 8
    $region9: #{tpu_custom_call.1} parent=1 // pred_fallthru
      _
    // Predicated region
    $region10: #{tpu_custom_call.1} parent=1 // pred_check
      _
    $region11: #{tpu_custom_call.1} parent=1 // pred_check_branch
      %39 = sbr.rel (0) target = $region13
    $region12: #{tpu_custom_call.1} parent=1 // pred_region
      %s41 = ssub.s32 32, 32
      %42 = vsyncadd [#allocation6], %s41
      %s44 = sshll.u32 [#allocation7], 4
      %s45 = int_to_ptr.vmem [resolvable:$true] %s44
      %47 = dma.hbm_to_vmem [thread:$0]  %s2, 32, %s45, [#allocation6]
    $region13: #{tpu_custom_call.1} parent=1 // pred_fallthru
      _
    // Predicated region
    $region14: #{tpu_custom_call.1} parent=1 // pred_check
      _
    $region15: #{tpu_custom_call.1} parent=1 // pred_check_branch
      %49 = sbr.rel (0) target = $region17
    $region16: #{tpu_custom_call.1} parent=1 // pred_region
      %s51 = ssub.s32 8192, 8192
      %52 = vsyncadd [#allocation9], %s51
      %s53 = sshll.u32 [#allocation8], 4
      %s54 = int_to_ptr.vmem [resolvable:$true] %s53
      %59 = dma.hbm_to_vmem [thread:$0]  %s3, 8192, %s54, [#allocation9], 256, 256, 16
    $region17: #{tpu_custom_call.1} parent=1 // pred_fallthru
      _
    // Predicated region
    $region18: #{tpu_custom_call.1} parent=1 // pred_check
      _
    $region19: #{tpu_custom_call.1} parent=1 // pred_check_branch
      %61 = sbr.rel (0) target = $region21
    $region20: #{tpu_custom_call.1} parent=1 // pred_region
      _
    $region21: #{tpu_custom_call.1} parent=1 // pred_fallthru
      _
    // Predicated region
    $region22: #{tpu_custom_call.1} parent=1 // pred_check
      _
    $region23: #{tpu_custom_call.1} parent=1 // pred_check_branch
      %63 = sbr.rel (0) target = $region25
    $region24: #{tpu_custom_call.1} parent=1 // pred_region
      _
    $region25: #{tpu_custom_call.1} parent=1 // pred_fallthru
      _
    // Predicated region
    $region26: #{tpu_custom_call.1} parent=1 // pred_check
      _
    $region27: #{tpu_custom_call.1} parent=1 // pred_check_branch
      %65 = sbr.rel (0) target = $region29
    $region28: #{tpu_custom_call.1} parent=1 // pred_region
      _
    $region29: #{tpu_custom_call.1} parent=1 // pred_fallthru
      _
    // Predicated region
    $region30: #{tpu_custom_call.1} parent=1 // pred_check
      _
    $region31: #{tpu_custom_call.1} parent=1 // pred_check_branch
      %67 = sbr.rel (0) target = $region33
    $region32: #{tpu_custom_call.1} parent=1 // pred_region
      %68 = dma.done [#allocation4], 64
    $region33: #{tpu_custom_call.1} parent=1 // pred_fallthru
      _
    // Predicated region
    $region34: #{tpu_custom_call.1} parent=1 // pred_check
      _
    $region35: #{tpu_custom_call.1} parent=1 // pred_check_branch
      %70 = sbr.rel (0) target = $region37
    $region36: #{tpu_custom_call.1} parent=1 // pred_region
      %71 = dma.done [#allocation6], 512
    $region37: #{tpu_custom_call.1} parent=1 // pred_fallthru
      _
    // Predicated region
    $region38: #{tpu_custom_call.1} parent=1 // pred_check
      _
    $region39: #{tpu_custom_call.1} parent=1 // pred_check_branch
      %73 = sbr.rel (0) target = $region41
    $region40: #{tpu_custom_call.1} parent=1 // pred_region
      %74 = dma.done [#allocation6], 32
    $region41: #{tpu_custom_call.1} parent=1 // pred_fallthru
      _
    // Predicated region
    $region42: #{tpu_custom_call.1} parent=1 // pred_check
      _
    $region43: #{tpu_custom_call.1} parent=1 // pred_check_branch
      %76 = sbr.rel (0) target = $region45
    $region44: #{tpu_custom_call.1} parent=1 // pred_region
      %77 = dma.done [#allocation9], 8192
    $region45: #{tpu_custom_call.1} parent=1 // pred_fallthru
      _
    %v79 = vld [vmem:[#allocation3] sm:$0xf]
    %v80 = vld [vmem:[#allocation5] sm:$0xff]
    %v81 = vld [vmem:[#allocation5 + $0x8] sm:$0xff]
    %v82 = vld [vmem:[#allocation5 + $0x10] sm:$0xff]
    %v83 = vld [vmem:[#allocation5 + $0x18] sm:$0xff]
    %v84 = vld [vmem:[#allocation7] sm:$0x3]
    %v86 = vlaneseq
    %v87 = vshrl.u32 %v86, 7
    %v88 = vsub.s32 0, %v87
    %v89 = vrot.slane %v84, %v88
    %v90 = vlaneseq
    %v91 = vshrl.u32 %v90, 7
    %v92 = vsub.s32 1, %v91
    %v93 = vrot.slane %v84, %v92
    %v100 = vunpack.c.l.b16 %v80
    %v101 = vunpack.c.h.b16 %v80
    %v102 = vunpack.c.l.b16 %v81
    %v103 = vunpack.c.h.b16 %v81
    %v104 = vunpack.c.l.b16 %v82
    %v105 = vunpack.c.h.b16 %v82
    %v106 = vunpack.c.l.b16 %v83
    %v107 = vunpack.c.h.b16 %v83
    %v108 = vpack.c.b16 %v102, %v100
    %v109 = vpack.c.b16 %v103, %v101
    %v110 = vpack.c.b16 %v106, %v104
    %v111 = vpack.c.b16 %v107, %v105
    %vm116 = vcmask 261120
    %v118 = vsel %vm116, %v79, 0
    %120 = vmatprep.subr.bf16.mxu0 0
    %121 = vmatpush1.bf16.msra.mxu0 0
    %122 = vmatprep.subr.bf16.mxu0 0
    %123 = vmatpush1.bf16.msra.mxu0 0
    %124 = vmatprep.subr.bf16.mxu0 0
    %125 = vmatpush1.bf16.msra.mxu0 0
    %126 = vmatprep.subr.bf16.mxu0 0
    %127 = vmatpush1.bf16.msra.mxu0 0
    %128 = vmatprep.subr.bf16.mxu0 0
    %129 = vmatpush1.bf16.msra.mxu0 0
    %130 = vmatprep.subr.bf16.mxu0 0
    %131 = vmatpush1.bf16.msra.mxu0 0
    %132 = vmatprep.subr.bf16.mxu0 %v111
    %133 = vmatpush1.bf16.msra.mxu0 %v110
    %134 = vmatprep.subr.bf16.mxu0 %v109
    %135 = vmatpush1.bf16.msra.mxu0 %v108
    %136 = vmatprep.subr.bf16.mxu0 0
    %137 = vmatpush2.bf16.msra.mxu0 0
    %138 = vmatprep.subr.bf16.mxu0 0
    %139 = vmatpush2.bf16.msra.mxu0 0
    %140 = vmatprep.subr.bf16.mxu0 0
    %141 = vmatpush2.bf16.msra.mxu0 0
    %142 = vmatprep.subr.bf16.mxu0 0
    %143 = vmatpush2.bf16.msra.mxu0 0
    %144 = vmatprep.subr.bf16.mxu0 0
    %145 = vmatpush2.bf16.msra.mxu0 0
    %146 = vmatprep.subr.bf16.mxu0 0
    %147 = vmatpush2.bf16.msra.mxu0 0
    %148 = vmatprep.subr.bf16.mxu0 0
    %149 = vmatpush2.bf16.msra.mxu0 0
    %150 = vmatprep.subr.bf16.mxu0 0
    %151 = vmatpush2.bf16.msra.mxu0 0
    %152 = vmatprep.mubr.bf16.mxu0 0
    %153 = vmatmul.mubr.bf16.gmra.mxu0 %v118
    %v154 = vpop.f32.mrf.mxu0
    %v155 = vadd.f32 %v89, %v154
    %v156 = vpop.f32.mrf.mxu0
    %v157 = vadd.f32 %v93, %v156
    %v158 = vpop.f32.mrf.mxu0
    %v159 = vpop.f32.mrf.mxu0
    %160 = vdwg.mxu0
    %v161 = vmax.f32 %v155, 0.0
    %v162 = vmax.f32 %v157, 0.0
    %v163 = vpack.c.bf16 %v161, %v161
    %v164 = vpack.c.bf16 %v162, %v162
    %v165 = vld [vmem:[#allocation8] sm:$0xff]
    %v166 = vld [vmem:[#allocation8 + $0x8] sm:$0xff]
    %v167 = vld [vmem:[#allocation8 + $0x10] sm:$0xff]
    %v168 = vld [vmem:[#allocation8 + $0x18] sm:$0xff]
    %v169 = vld [vmem:[#allocation8 + $0x20] sm:$0xff]
    %v170 = vld [vmem:[#allocation8 + $0x28] sm:$0xff]
    %v171 = vld [vmem:[#allocation8 + $0x30] sm:$0xff]
    %v172 = vld [vmem:[#allocation8 + $0x38] sm:$0xff]
    %v173 = vld [vmem:[#allocation8 + $0x40] sm:$0xff]
    %v174 = vld [vmem:[#allocation8 + $0x48] sm:$0xff]
    %v175 = vld [vmem:[#allocation8 + $0x50] sm:$0xff]
    %v176 = vld [vmem:[#allocation8 + $0x58] sm:$0xff]
    %v177 = vld [vmem:[#allocation8 + $0x60] sm:$0xff]
    %v178 = vld [vmem:[#allocation8 + $0x68] sm:$0xff]
    %v179 = vld [vmem:[#allocation8 + $0x70] sm:$0xff]
    %v180 = vld [vmem:[#allocation8 + $0x78] sm:$0xff]
    %v181 = vld [vmem:[#allocation8 + $0x80] sm:$0xff]
    %v182 = vld [vmem:[#allocation8 + $0x88] sm:$0xff]
    %v183 = vld [vmem:[#allocation8 + $0x90] sm:$0xff]
    %v184 = vld [vmem:[#allocation8 + $0x98] sm:$0xff]
    %v185 = vld [vmem:[#allocation8 + $0xa0] sm:$0xff]
    %v186 = vld [vmem:[#allocation8 + $0xa8] sm:$0xff]
    %v187 = vld [vmem:[#allocation8 + $0xb0] sm:$0xff]
    %v188 = vld [vmem:[#allocation8 + $0xb8] sm:$0xff]
    %v189 = vld [vmem:[#allocation8 + $0xc0] sm:$0xff]
    %v190 = vld [vmem:[#allocation8 + $0xc8] sm:$0xff]
    %v191 = vld [vmem:[#allocation8 + $0xd0] sm:$0xff]
    %v192 = vld [vmem:[#allocation8 + $0xd8] sm:$0xff]
    %v193 = vld [vmem:[#allocation8 + $0xe0] sm:$0xff]
    %v194 = vld [vmem:[#allocation8 + $0xe8] sm:$0xff]
    %v195 = vld [vmem:[#allocation8 + $0xf0] sm:$0xff]
    %v196 = vld [vmem:[#allocation8 + $0xf8] sm:$0xff]
    %v197 = vld [vmem:[#allocation8 + $0x100] sm:$0xff]
    %v198 = vld [vmem:[#allocation8 + $0x108] sm:$0xff]
    %v199 = vld [vmem:[#allocation8 + $0x110] sm:$0xff]
    %v200 = vld [vmem:[#allocation8 + $0x118] sm:$0xff]
    %v201 = vld [vmem:[#allocation8 + $0x120] sm:$0xff]
    %v202 = vld [vmem:[#allocation8 + $0x128] sm:$0xff]
    %v203 = vld [vmem:[#allocation8 + $0x130] sm:$0xff]
    %v204 = vld [vmem:[#allocation8 + $0x138] sm:$0xff]
    %v205 = vld [vmem:[#allocation8 + $0x140] sm:$0xff]
    %v206 = vld [vmem:[#allocation8 + $0x148] sm:$0xff]
    %v207 = vld [vmem:[#allocation8 + $0x150] sm:$0xff]
    %v208 = vld [vmem:[#allocation8 + $0x158] sm:$0xff]
    %v209 = vld [vmem:[#allocation8 + $0x160] sm:$0xff]
    %v210 = vld [vmem:[#allocation8 + $0x168] sm:$0xff]
    %v211 = vld [vmem:[#allocation8 + $0x170] sm:$0xff]
    %v212 = vld [vmem:[#allocation8 + $0x178] sm:$0xff]
    %v213 = vld [vmem:[#allocation8 + $0x180] sm:$0xff]
    %v214 = vld [vmem:[#allocation8 + $0x188] sm:$0xff]
    %v215 = vld [vmem:[#allocation8 + $0x190] sm:$0xff]
    %v216 = vld [vmem:[#allocation8 + $0x198] sm:$0xff]
    %v217 = vld [vmem:[#allocation8 + $0x1a0] sm:$0xff]
    %v218 = vld [vmem:[#allocation8 + $0x1a8] sm:$0xff]
    %v219 = vld [vmem:[#allocation8 + $0x1b0] sm:$0xff]
    %v220 = vld [vmem:[#allocation8 + $0x1b8] sm:$0xff]
    %v221 = vld [vmem:[#allocation8 + $0x1c0] sm:$0xff]
    %v222 = vld [vmem:[#allocation8 + $0x1c8] sm:$0xff]
    %v223 = vld [vmem:[#allocation8 + $0x1d0] sm:$0xff]
    %v224 = vld [vmem:[#allocation8 + $0x1d8] sm:$0xff]
    %v225 = vld [vmem:[#allocation8 + $0x1e0] sm:$0xff]
    %v226 = vld [vmem:[#allocation8 + $0x1e8] sm:$0xff]
    %v227 = vld [vmem:[#allocation8 + $0x1f0] sm:$0xff]
    %v228 = vld [vmem:[#allocation8 + $0x1f8] sm:$0xff]
    %v229 = vld [vmem:[%s4] sm:$0xf]
    %v231 = vlaneseq
    %v232 = vshrl.u32 %v231, 7
    %v233 = vsub.s32 0, %v232
    %v234 = vrot.slane %v229, %v233
    %v235 = vlaneseq
    %v236 = vshrl.u32 %v235, 7
    %v237 = vsub.s32 1, %v236
    %v238 = vrot.slane %v229, %v237
    %v239 = vlaneseq
    %v240 = vshrl.u32 %v239, 7
    %v241 = vsub.s32 2, %v240
    %v242 = vrot.slane %v229, %v241
    %v243 = vlaneseq
    %v244 = vshrl.u32 %v243, 7
    %v245 = vsub.s32 3, %v244
    %v246 = vrot.slane %v229, %v245
    %v315 = vunpack.c.l.b16 %v165
    %v316 = vunpack.c.h.b16 %v165
    %v317 = vunpack.c.l.b16 %v166
    %v318 = vunpack.c.h.b16 %v166
    %v319 = vunpack.c.l.b16 %v167
    %v320 = vunpack.c.h.b16 %v167
    %v321 = vunpack.c.l.b16 %v168
    %v322 = vunpack.c.h.b16 %v168
    %v323 = vunpack.c.l.b16 %v169
    %v324 = vunpack.c.h.b16 %v169
    %v325 = vunpack.c.l.b16 %v170
    %v326 = vunpack.c.h.b16 %v170
    %v327 = vunpack.c.l.b16 %v171
    %v328 = vunpack.c.h.b16 %v171
    %v329 = vunpack.c.l.b16 %v172
    %v330 = vunpack.c.h.b16 %v172
    %v331 = vunpack.c.l.b16 %v173
    %v332 = vunpack.c.h.b16 %v173
    %v333 = vunpack.c.l.b16 %v174
    %v334 = vunpack.c.h.b16 %v174
    %v335 = vunpack.c.l.b16 %v175
    %v336 = vunpack.c.h.b16 %v175
    %v337 = vunpack.c.l.b16 %v176
    %v338 = vunpack.c.h.b16 %v176
    %v339 = vunpack.c.l.b16 %v177
    %v340 = vunpack.c.h.b16 %v177
    %v341 = vunpack.c.l.b16 %v178
    %v342 = vunpack.c.h.b16 %v178
    %v343 = vunpack.c.l.b16 %v179
    %v344 = vunpack.c.h.b16 %v179
    %v345 = vunpack.c.l.b16 %v180
    %v346 = vunpack.c.h.b16 %v180
    %v347 = vunpack.c.l.b16 %v181
    %v348 = vunpack.c.h.b16 %v181
    %v349 = vunpack.c.l.b16 %v182
    %v350 = vunpack.c.h.b16 %v182
    %v351 = vunpack.c.l.b16 %v183
    %v352 = vunpack.c.h.b16 %v183
    %v353 = vunpack.c.l.b16 %v184
    %v354 = vunpack.c.h.b16 %v184
    %v355 = vunpack.c.l.b16 %v185
    %v356 = vunpack.c.h.b16 %v185
    %v357 = vunpack.c.l.b16 %v186
    %v358 = vunpack.c.h.b16 %v186
    %v359 = vunpack.c.l.b16 %v187
    %v360 = vunpack.c.h.b16 %v187
    %v361 = vunpack.c.l.b16 %v188
    %v362 = vunpack.c.h.b16 %v188
    %v363 = vunpack.c.l.b16 %v189
    %v364 = vunpack.c.h.b16 %v189
    %v365 = vunpack.c.l.b16 %v190
    %v366 = vunpack.c.h.b16 %v190
    %v367 = vunpack.c.l.b16 %v191
    %v368 = vunpack.c.h.b16 %v191
    %v369 = vunpack.c.l.b16 %v192
    %v370 = vunpack.c.h.b16 %v192
    %v371 = vunpack.c.l.b16 %v193
    %v372 = vunpack.c.h.b16 %v193
    %v373 = vunpack.c.l.b16 %v194
    %v374 = vunpack.c.h.b16 %v194
    %v375 = vunpack.c.l.b16 %v195
    %v376 = vunpack.c.h.b16 %v195
    %v377 = vunpack.c.l.b16 %v196
    %v378 = vunpack.c.h.b16 %v196
    %v379 = vunpack.c.l.b16 %v197
    %v380 = vunpack.c.h.b16 %v197
    %v381 = vunpack.c.l.b16 %v198
    %v382 = vunpack.c.h.b16 %v198
    %v383 = vunpack.c.l.b16 %v199
    %v384 = vunpack.c.h.b16 %v199
    %v385 = vunpack.c.l.b16 %v200
    %v386 = vunpack.c.h.b16 %v200
    %v387 = vunpack.c.l.b16 %v201
    %v388 = vunpack.c.h.b16 %v201
    %v389 = vunpack.c.l.b16 %v202
    %v390 = vunpack.c.h.b16 %v202
    %v391 = vunpack.c.l.b16 %v203
    %v392 = vunpack.c.h.b16 %v203
    %v393 = vunpack.c.l.b16 %v204
    %v394 = vunpack.c.h.b16 %v204
    %v395 = vunpack.c.l.b16 %v205
    %v396 = vunpack.c.h.b16 %v205
    %v397 = vunpack.c.l.b16 %v206
    %v398 = vunpack.c.h.b16 %v206
    %v399 = vunpack.c.l.b16 %v207
    %v400 = vunpack.c.h.b16 %v207
    %v401 = vunpack.c.l.b16 %v208
    %v402 = vunpack.c.h.b16 %v208
    %v403 = vunpack.c.l.b16 %v209
    %v404 = vunpack.c.h.b16 %v209
    %v405 = vunpack.c.l.b16 %v210
    %v406 = vunpack.c.h.b16 %v210
    %v407 = vunpack.c.l.b16 %v211
    %v408 = vunpack.c.h.b16 %v211
    %v409 = vunpack.c.l.b16 %v212
    %v410 = vunpack.c.h.b16 %v212
    %v411 = vunpack.c.l.b16 %v213
    %v412 = vunpack.c.h.b16 %v213
    %v413 = vunpack.c.l.b16 %v214
    %v414 = vunpack.c.h.b16 %v214
    %v415 = vunpack.c.l.b16 %v215
    %v416 = vunpack.c.h.b16 %v215
    %v417 = vunpack.c.l.b16 %v216
    %v418 = vunpack.c.h.b16 %v216
    %v419 = vunpack.c.l.b16 %v217
    %v420 = vunpack.c.h.b16 %v217
    %v421 = vunpack.c.l.b16 %v218
    %v422 = vunpack.c.h.b16 %v218
    %v423 = vunpack.c.l.b16 %v219
    %v424 = vunpack.c.h.b16 %v219
    %v425 = vunpack.c.l.b16 %v220
    %v426 = vunpack.c.h.b16 %v220
    %v427 = vunpack.c.l.b16 %v221
    %v428 = vunpack.c.h.b16 %v221
    %v429 = vunpack.c.l.b16 %v222
    %v430 = vunpack.c.h.b16 %v222
    %v431 = vunpack.c.l.b16 %v223
    %v432 = vunpack.c.h.b16 %v223
    %v433 = vunpack.c.l.b16 %v224
    %v434 = vunpack.c.h.b16 %v224
    %v435 = vunpack.c.l.b16 %v225
    %v436 = vunpack.c.h.b16 %v225
    %v437 = vunpack.c.l.b16 %v226
    %v438 = vunpack.c.h.b16 %v226
    %v439 = vunpack.c.l.b16 %v227
    %v440 = vunpack.c.h.b16 %v227
    %v441 = vunpack.c.l.b16 %v228
    %v442 = vunpack.c.h.b16 %v228
    %v443 = vpack.c.b16 %v319, %v315
    %v444 = vpack.c.b16 %v320, %v316
    %v445 = vpack.c.b16 %v321, %v317
    %v446 = vpack.c.b16 %v322, %v318
    %v447 = vpack.c.b16 %v327, %v323
    %v448 = vpack.c.b16 %v328, %v324
    %v449 = vpack.c.b16 %v329, %v325
    %v450 = vpack.c.b16 %v330, %v326
    %v451 = vpack.c.b16 %v335, %v331
    %v452 = vpack.c.b16 %v336, %v332
    %v453 = vpack.c.b16 %v337, %v333
    %v454 = vpack.c.b16 %v338, %v334
    %v455 = vpack.c.b16 %v343, %v339
    %v456 = vpack.c.b16 %v344, %v340
    %v457 = vpack.c.b16 %v345, %v341
    %v458 = vpack.c.b16 %v346, %v342
    %v459 = vpack.c.b16 %v351, %v347
    %v460 = vpack.c.b16 %v352, %v348
    %v461 = vpack.c.b16 %v353, %v349
    %v462 = vpack.c.b16 %v354, %v350
    %v463 = vpack.c.b16 %v359, %v355
    %v464 = vpack.c.b16 %v360, %v356
    %v465 = vpack.c.b16 %v361, %v357
    %v466 = vpack.c.b16 %v362, %v358
    %v467 = vpack.c.b16 %v367, %v363
    %v468 = vpack.c.b16 %v368, %v364
    %v469 = vpack.c.b16 %v369, %v365
    %v470 = vpack.c.b16 %v370, %v366
    %v471 = vpack.c.b16 %v375, %v371
    %v472 = vpack.c.b16 %v376, %v372
    %v473 = vpack.c.b16 %v377, %v373
    %v474 = vpack.c.b16 %v378, %v374
    %v475 = vpack.c.b16 %v383, %v379
    %v476 = vpack.c.b16 %v384, %v380
    %v477 = vpack.c.b16 %v385, %v381
    %v478 = vpack.c.b16 %v386, %v382
    %v479 = vpack.c.b16 %v391, %v387
    %v480 = vpack.c.b16 %v392, %v388
    %v481 = vpack.c.b16 %v393, %v389
    %v482 = vpack.c.b16 %v394, %v390
    %v483 = vpack.c.b16 %v399, %v395
    %v484 = vpack.c.b16 %v400, %v396
    %v485 = vpack.c.b16 %v401, %v397
    %v486 = vpack.c.b16 %v402, %v398
    %v487 = vpack.c.b16 %v407, %v403
    %v488 = vpack.c.b16 %v408, %v404
    %v489 = vpack.c.b16 %v409, %v405
    %v490 = vpack.c.b16 %v410, %v406
    %v491 = vpack.c.b16 %v415, %v411
    %v492 = vpack.c.b16 %v416, %v412
    %v493 = vpack.c.b16 %v417, %v413
    %v494 = vpack.c.b16 %v418, %v414
    %v495 = vpack.c.b16 %v423, %v419
    %v496 = vpack.c.b16 %v424, %v420
    %v497 = vpack.c.b16 %v425, %v421
    %v498 = vpack.c.b16 %v426, %v422
    %v499 = vpack.c.b16 %v431, %v427
    %v500 = vpack.c.b16 %v432, %v428
    %v501 = vpack.c.b16 %v433, %v429
    %v502 = vpack.c.b16 %v434, %v430
    %v503 = vpack.c.b16 %v439, %v435
    %v504 = vpack.c.b16 %v440, %v436
    %v505 = vpack.c.b16 %v441, %v437
    %v506 = vpack.c.b16 %v442, %v438
    %571 = vmatprep.subr.bf16.mxu0 %v472
    %572 = vmatpush1.bf16.msra.mxu0 %v471
    %573 = vmatprep.subr.bf16.mxu0 %v468
    %574 = vmatpush1.bf16.msra.mxu0 %v467
    %575 = vmatprep.subr.bf16.mxu0 %v464
    %576 = vmatpush1.bf16.msra.mxu0 %v463
    %577 = vmatprep.subr.bf16.mxu0 %v460
    %578 = vmatpush1.bf16.msra.mxu0 %v459
    %579 = vmatprep.subr.bf16.mxu0 %v456
    %580 = vmatpush1.bf16.msra.mxu0 %v455
    %581 = vmatprep.subr.bf16.mxu0 %v452
    %582 = vmatpush1.bf16.msra.mxu0 %v451
    %583 = vmatprep.subr.bf16.mxu0 %v448
    %584 = vmatpush1.bf16.msra.mxu0 %v447
    %585 = vmatprep.subr.bf16.mxu0 %v444
    %586 = vmatpush1.bf16.msra.mxu0 %v443
    %587 = vmatprep.subr.bf16.mxu0 %v504
    %588 = vmatpush2.bf16.msra.mxu0 %v503
    %589 = vmatprep.subr.bf16.mxu0 %v500
    %590 = vmatpush2.bf16.msra.mxu0 %v499
    %591 = vmatprep.subr.bf16.mxu0 %v496
    %592 = vmatpush2.bf16.msra.mxu0 %v495
    %593 = vmatprep.subr.bf16.mxu0 %v492
    %594 = vmatpush2.bf16.msra.mxu0 %v491
    %595 = vmatprep.subr.bf16.mxu0 %v488
    %596 = vmatpush2.bf16.msra.mxu0 %v487
    %597 = vmatprep.subr.bf16.mxu0 %v484
    %598 = vmatpush2.bf16.msra.mxu0 %v483
    %599 = vmatprep.subr.bf16.mxu0 %v480
    %600 = vmatpush2.bf16.msra.mxu0 %v479
    %601 = vmatprep.subr.bf16.mxu0 %v476
    %602 = vmatpush2.bf16.msra.mxu0 %v475
    %603 = vmatprep.mubr.bf16.mxu0 %v164
    %604 = vmatmul.mubr.bf16.gmra.mxu0 %v163
    %v605 = vpop.f32.mrf.mxu0
    %v606 = vadd.f32 %v234, %v605
    %v607 = vpop.f32.mrf.mxu0
    %v608 = vadd.f32 %v238, %v607
    %v609 = vpop.f32.mrf.mxu0
    %v610 = vpop.f32.mrf.mxu0
    %611 = vdwg.mxu0
    %612 = vmatprep.subr.bf16.mxu0 %v474
    %613 = vmatpush1.bf16.msra.mxu0 %v473
    %614 = vmatprep.subr.bf16.mxu0 %v470
    %615 = vmatpush1.bf16.msra.mxu0 %v469
    %616 = vmatprep.subr.bf16.mxu0 %v466
    %617 = vmatpush1.bf16.msra.mxu0 %v465
    %618 = vmatprep.subr.bf16.mxu0 %v462
    %619 = vmatpush1.bf16.msra.mxu0 %v461
    %620 = vmatprep.subr.bf16.mxu0 %v458
    %621 = vmatpush1.bf16.msra.mxu0 %v457
    %622 = vmatprep.subr.bf16.mxu0 %v454
    %623 = vmatpush1.bf16.msra.mxu0 %v453
    %624 = vmatprep.subr.bf16.mxu0 %v450
    %625 = vmatpush1.bf16.msra.mxu0 %v449
    %626 = vmatprep.subr.bf16.mxu0 %v446
    %627 = vmatpush1.bf16.msra.mxu0 %v445
    %628 = vmatprep.subr.bf16.mxu0 %v506
    %629 = vmatpush2.bf16.msra.mxu0 %v505
    %630 = vmatprep.subr.bf16.mxu0 %v502
    %631 = vmatpush2.bf16.msra.mxu0 %v501
    %632 = vmatprep.subr.bf16.mxu0 %v498
    %633 = vmatpush2.bf16.msra.mxu0 %v497
    %634 = vmatprep.subr.bf16.mxu0 %v494
    %635 = vmatpush2.bf16.msra.mxu0 %v493
    %636 = vmatprep.subr.bf16.mxu0 %v490
    %637 = vmatpush2.bf16.msra.mxu0 %v489
    %638 = vmatprep.subr.bf16.mxu0 %v486
    %639 = vmatpush2.bf16.msra.mxu0 %v485
    %640 = vmatprep.subr.bf16.mxu0 %v482
    %641 = vmatpush2.bf16.msra.mxu0 %v481
    %642 = vmatprep.subr.bf16.mxu0 %v478
    %643 = vmatpush2.bf16.msra.mxu0 %v477
    %644 = vmatprep.mubr.bf16.mxu0 %v164
    %645 = vmatmul.mubr.bf16.gmra.mxu0 %v163
    %v646 = vpop.f32.mrf.mxu0
    %v647 = vadd.f32 %v242, %v646
    %v648 = vpop.f32.mrf.mxu0
    %v649 = vadd.f32 %v246, %v648
    %v650 = vpop.f32.mrf.mxu0
    %v651 = vpop.f32.mrf.mxu0
    %652 = vdwg.mxu0
    %v653 = vmax.f32 %v606, 0.0
    %v654 = vmax.f32 %v608, 0.0
    %v655 = vmax.f32 %v647, 0.0
    %v656 = vmax.f32 %v649, 0.0
    %v657 = vld [vmem:[%s5] sm:$0xf]
    %v659 = vlaneseq
    %v660 = vshrl.u32 %v659, 7
    %v661 = vsub.s32 0, %v660
    %v662 = vrot.slane %v657, %v661
    %v663 = vlaneseq
    %v664 = vshrl.u32 %v663, 7
    %v665 = vsub.s32 1, %v664
    %v666 = vrot.slane %v657, %v665
    %v667 = vlaneseq
    %v668 = vshrl.u32 %v667, 7
    %v669 = vsub.s32 2, %v668
    %v670 = vrot.slane %v657, %v669
    %v671 = vlaneseq
    %v672 = vshrl.u32 %v671, 7
    %v673 = vsub.s32 3, %v672
    %v674 = vrot.slane %v657, %v673
    %v679 = vmul.f32 %v653, %v662
    %v680 = vmul.f32 %v654, %v666
    %v681 = vmul.f32 %v655, %v670
    %v682 = vmul.f32 %v656, %v674
    %v683 = vadd.f32 %v679, %v680
    %v684 = vadd.f32 %v683, %v681
    %v685 = vadd.f32 %v684, %v682
    %686 = vadd.xlane.f32.xlu0 %v685
    %v687 = vpop.xlane.xlu0 %686
    %s688 = sld [smem:[#allocation2]]
    %v689 = vstv %s688
    %v690 = vadd.f32 %v687, %v689
    %v691 = vxor.u32 %v690, 2147483648
    %v692 = vmul.f32 %v691, 1.442695
    %v693 = vpow.pop %v692
    %v694 = vadd.f32 %v693, 1.0
    %v695 = vrcp.pop %v694
    %v696 = vmul.f32 1.0, %v695
    %vm697 = vcmask 7168
    %698 = vst.msk [vmem:[%s7] sm:$0xff] %vm697, %v696
    // Predicated region
    $region46: #{tpu_custom_call.1} parent=1 // pred_check
      _
    $region47: #{tpu_custom_call.1} parent=1 // pred_check_branch
      %700 = sbr.rel (0) target = $region49
    $region48: #{tpu_custom_call.1} parent=1 // pred_region
      _
    $region49: #{tpu_custom_call.1} parent=1 // pred_fallthru
      _
    // Predicated region
    $region50: #{tpu_custom_call.1} parent=1 // pred_check
      _
    $region51: #{tpu_custom_call.1} parent=1 // pred_check_branch
      %702 = sbr.rel (0) target = $region53
    $region52: #{tpu_custom_call.1} parent=1 // pred_region
      _
    $region53: #{tpu_custom_call.1} parent=1 // pred_fallthru
      _
    %703 = vsyncpa [#allocation4], 1
    %704 = vsyncpa [#allocation6], 1
    %705 = vsyncpa [#allocation9], 1

</llo_original>
